<compile_context>
chip_gen: v7x
topology: tpu7x:2x2x1
jax: 0.10.0
libtpu: 0.0.40
codegen_flags: <defaults>
</compile_context>

<pallas_src>
import functools

import jax
import jax.numpy as jnp
from jax.experimental import pallas as pl
from jax.experimental.pallas import tpu as pltpu


def _round_up(x: int, m: int) -> int:
    return ((x + m - 1) // m) * m


def _exp_cos_loss_kernel(pre_ref, lab_ref, out_ref, *, total_n, tile_cols,
                         tiles_per_core):
    """One (D, TB) column tile: accumulate exp(1 - min(|<p,l>|, 1)) per lane."""
    c = pl.program_id(0)          # core split (parallel)
    i = pl.program_id(1)          # reduction over column tiles (arbitrary)

    @pl.when(i == 0)
    def _():
        out_ref[...] = jnp.zeros_like(out_ref)

    prod = pre_ref[...] * lab_ref[...]                  # (D, TB)  VPU
    dot = jnp.sum(prod, axis=0, keepdims=True)          # (1, TB)  tiny sublane reduce
    dot = jnp.minimum(jnp.abs(dot), 1.0)                # clamp (lower bound dead)
    e = jnp.exp(1.0 - dot)                              # (1, TB)  EUP

    # Mask padded columns (global column index >= total_n).
    base = (c * tiles_per_core + i) * tile_cols
    col = base + jax.lax.broadcasted_iota(jnp.int32, (1, tile_cols), 1)
    e = jnp.where(col < total_n, e, 0.0)

    out_ref[...] += e[None]                             # lane-dense accumulate


def exp_cos_distance_loss(ori_pre: jax.Array, ori_label: jax.Array,
                          tile_cols: int = 128 * 1024) -> jax.Array:
    assert ori_pre.shape == ori_label.shape and ori_pre.ndim == 2
    n, d = ori_pre.shape

    # Lane-dense layout: reduced axis (D) on sublanes, batch axis (N) on lanes.
    pre_t = ori_pre.astype(jnp.float32).T               # (D, N)
    lab_t = ori_label.astype(jnp.float32).T

    tb = min(_round_up(n, 128), _round_up(tile_cols, 128))
    padded_n = _round_up(n, tb)
    num_tiles = padded_n // tb
    num_cores = 2 if num_tiles % 2 == 0 else 1          # v7x megacore split
    tiles_per_core = num_tiles // num_cores

    if padded_n != n:
        pad = padded_n - n
        pre_t = jnp.pad(pre_t, ((0, 0), (0, pad)))
        lab_t = jnp.pad(lab_t, ((0, 0), (0, pad)))

    kernel = functools.partial(
        _exp_cos_loss_kernel, total_n=n, tile_cols=tb,
        tiles_per_core=tiles_per_core)

    in_map = lambda c, i: (0, c * tiles_per_core + i)

    partial = pl.pallas_call(
        kernel,
        out_shape=jax.ShapeDtypeStruct((num_cores, 1, tb), jnp.float32),
        grid_spec=pltpu.PrefetchScalarGridSpec(
            num_scalar_prefetch=0,
            grid=(num_cores, tiles_per_core),
            in_specs=[
                pl.BlockSpec((d, tb), in_map),
                pl.BlockSpec((d, tb), in_map),
            ],
            out_specs=pl.BlockSpec((1, 1, tb), lambda c, i: (c, 0, 0)),
        ),
        compiler_params=pltpu.CompilerParams(
            dimension_semantics=("parallel", "arbitrary"),
            vmem_limit_bytes=32 * 1024 * 1024,
        ),
    )(pre_t, lab_t)

    # Single final cross-lane reduce + mean on a tiny (num_cores, 1, TB) array.
    return jnp.sum(partial) / n


def _reference(ori_pre, ori_label):
    dot = jnp.abs(jnp.sum(ori_pre * ori_label, axis=1))
    dot = jnp.clip(dot, -1.0, 1.0)
    return jnp.mean(jnp.exp(1.0 - dot))


if __name__ == "__main__":
    key = jax.random.PRNGKey(0)

    def make(k, n, d=4):
        k1, k2 = jax.random.split(k)
        p = jax.random.normal(k1, (n, d), dtype=jnp.float32)
        l = jax.random.normal(k2, (n, d), dtype=jnp.float32)
        p = p / jnp.linalg.norm(p, axis=1, keepdims=True)
        l = l / jnp.linalg.norm(l, axis=1, keepdims=True)
        return p, l

    k0, k1, k2 = jax.random.split(key, 3)

    # 1) typical SPEN-sized batch of unit quaternions (single tile, masked tail)
    p, l = make(k0, 16)
    out = exp_cos_distance_loss(p, l)
    jax.block_until_ready(out)
    ref = _reference(p, l)
    assert jnp.allclose(out, ref, rtol=1e-5, atol=1e-5), (out, ref)

    # 2) multi-tile + 2-core-split grid path (small tile just to exercise it)
    p, l = make(k1, 512)
    out = exp_cos_distance_loss(p, l, tile_cols=128)
    jax.block_until_ready(out)
    ref = _reference(p, l)
    assert jnp.allclose(out, ref, rtol=1e-5, atol=1e-5), (out, ref)

    # 3) ragged N (tail masking across tiles)
    p, l = make(k2, 300)
    out = exp_cos_distance_loss(p, l, tile_cols=128)
    jax.block_until_ready(out)
    ref = _reference(p, l)
    assert jnp.allclose(out, ref, rtol=1e-5, atol=1e-5), (out, ref)

    print("KERNEL_OK")
</pallas_src>

<mosaic_0001>
module attributes {stable_mosaic.version = 11 : i64} {
  func.func @_exp_cos_loss_kernel(%arg0: i32, %arg1: i32, %arg2: memref<4x128xf32, #tpu.memory_space<vmem>>, %arg3: memref<4x128xf32, #tpu.memory_space<vmem>>, %arg4: memref<1x1x128xf32, #tpu.memory_space<vmem>>) attributes {dimension_semantics = [#tpu.dimension_semantics<parallel>, #tpu.dimension_semantics<arbitrary>], iteration_bounds = array<i64: 1, 1>, scalar_prefetch = 0 : i64, scratch_operands = 0 : i64, tpu.core_type = #tpu.core_type<tc>, window_params = [{transform_indices = @transform_0, window_bounds = array<i64: 4, 128>}, {transform_indices = @transform_1, window_bounds = array<i64: 4, 128>}, {transform_indices = @transform_2, window_bounds = array<i64: 1, 1, 128>}]} {
    %c0_i32 = arith.constant 0 : i32
    %0 = arith.cmpi eq, %arg1, %c0_i32 : i32
    %1 = arith.extui %0 : i1 to i32
    %c0_i32_0 = arith.constant 0 : i32
    %2 = arith.cmpi ne, %1, %c0_i32_0 : i32
    scf.if %2 {
      %cst_13 = arith.constant 0.000000e+00 : f32
      %28 = vector.broadcast %cst_13 : f32 to vector<1x1x128xf32>
      %c0_14 = arith.constant 0 : index
      %c0_15 = arith.constant 0 : index
      %c0_16 = arith.constant 0 : index
      %29 = vector.load %arg4[%c0_14, %c0_15, %c0_16] : memref<1x1x128xf32, #tpu.memory_space<vmem>>, vector<1x1x128xf32>
      tpu.vector_store %arg4[%c0_14, %c0_15, %c0_16], %28 {strides = array<i32>} : memref<1x1x128xf32, #tpu.memory_space<vmem>>, vector<1x1x128xf32>,
    } else {
    }
    %c0 = arith.constant 0 : index
    %c0_1 = arith.constant 0 : index
    %3 = vector.load %arg2[%c0, %c0_1] : memref<4x128xf32, #tpu.memory_space<vmem>>, vector<4x128xf32>
    %c0_2 = arith.constant 0 : index
    %c0_3 = arith.constant 0 : index
    %4 = vector.load %arg3[%c0_2, %c0_3] : memref<4x128xf32, #tpu.memory_space<vmem>>, vector<4x128xf32>
    %5 = arith.mulf %3, %4 : vector<4x128xf32>
    %cst = arith.constant dense<0.000000e+00> : vector<128xf32>
    %6 = vector.multi_reduction <add>, %5, %cst [0] : vector<4x128xf32> to vector<128xf32>
    %7 = vector.shape_cast %6 : vector<128xf32> to vector<1x128xf32>
    %8 = math.absf %7 : vector<1x128xf32>
    %cst_4 = arith.constant 1.000000e+00 : f32
    %9 = vector.broadcast %cst_4 : f32 to vector<1x128xf32>
    %10 = arith.minimumf %8, %9 : vector<1x128xf32>
    %cst_5 = arith.constant 1.000000e+00 : f32
    %11 = vector.broadcast %cst_5 : f32 to vector<1x128xf32>
    %12 = arith.subf %11, %10 : vector<1x128xf32>
    %13 = math.exp %12 : vector<1x128xf32>
    %c1_i32 = arith.constant 1 : i32
    %14 = arith.muli %arg0, %c1_i32 : i32
    %15 = arith.addi %14, %arg1 : i32
    %c128_i32 = arith.constant 128 : i32
    %16 = arith.muli %15, %c128_i32 : i32
    %17 = tpu.iota {dimensions = array<i32: 1>} : vector<1x128xi32>
    %18 = vector.broadcast %16 : i32 to vector<1x128xi32>
    %19 = arith.addi %18, %17 : vector<1x128xi32>
    %c16_i32 = arith.constant 16 : i32
    %20 = vector.broadcast %c16_i32 : i32 to vector<1x128xi32>
    %21 = arith.cmpi slt, %19, %20 : vector<1x128xi32>
    %cst_6 = arith.constant 0.000000e+00 : f32
    %22 = vector.broadcast %cst_6 : f32 to vector<1x128xf32>
    %23 = arith.select %21, %13, %22 : vector<1x128xi1>, vector<1x128xf32>
    %c0_7 = arith.constant 0 : index
    %c0_8 = arith.constant 0 : index
    %c0_9 = arith.constant 0 : index
    %24 = vector.load %arg4[%c0_7, %c0_8, %c0_9] : memref<1x1x128xf32, #tpu.memory_space<vmem>>, vector<1x1x128xf32>
    %25 = vector.shape_cast %23 : vector<1x128xf32> to vector<1x1x128xf32>
    %26 = arith.addf %24, %25 : vector<1x1x128xf32>
    %c0_10 = arith.constant 0 : index
    %c0_11 = arith.constant 0 : index
    %c0_12 = arith.constant 0 : index
    %27 = vector.load %arg4[%c0_10, %c0_11, %c0_12] : memref<1x1x128xf32, #tpu.memory_space<vmem>>, vector<1x1x128xf32>
    tpu.vector_store %arg4[%c0_10, %c0_11, %c0_12], %26 {strides = array<i32>} : memref<1x1x128xf32, #tpu.memory_space<vmem>>, vector<1x1x128xf32>,
    return
  }
  func.func @transform_0(%arg0: i32, %arg1: i32) -> (i32, i32) {
    %c1_i32 = arith.constant 1 : i32
    %0 = arith.muli %arg0, %c1_i32 : i32
    %1 = arith.addi %0, %arg1 : i32
    %c0_i32 = arith.constant 0 : i32
    %c0_i32_0 = arith.constant 0 : i32
    return %c0_i32, %1 : i32, i32
  }
  func.func @transform_1(%arg0: i32, %arg1: i32) -> (i32, i32) {
    %c1_i32 = arith.constant 1 : i32
    %0 = arith.muli %arg0, %c1_i32 : i32
    %1 = arith.addi %0, %arg1 : i32
    %c0_i32 = arith.constant 0 : i32
    %c0_i32_0 = arith.constant 0 : i32
    return %c0_i32, %1 : i32, i32
  }
  func.func @transform_2(%arg0: i32, %arg1: i32) -> (i32, i32, i32) {
    %c0_i32 = arith.constant 0 : i32
    %c0_i32_0 = arith.constant 0 : i32
    %c0_i32_1 = arith.constant 0 : i32
    return %arg0, %c0_i32, %c0_i32_0 : i32, i32, i32
  }
}

</mosaic_0001>

<llo_original>
// kernel: tpu_custom_call.1
$region0: #{tpu_custom_call.1}
  #allocation0 [shape = 'u32[]', space=smem, size = 0x4, offset = 0x4, fixed_abs, tag = 'smem constant byte address 0x4 - core index']
  #allocation1 [shape = 'u32[144,128]{1,0:T(1,128)}', space=vmem, size = 0x12000, scoped, tag = 'internal scratch']
  %s0 = inlined_call_operand.hbm [shape: f32[4,128], index: 0, kind: input, shape index: {}]
  %s1 = inlined_call_operand.hbm [shape: f32[4,128], index: 1, kind: input, shape index: {}]
  %s2 = inlined_call_operand.hbm [shape: f32[1,1,128], index: 2, kind: output, shape index: {}]
  %s3 = sld [smem:[#allocation0]]
  $region30: #{tpu_custom_call.1} parent=0
    _
  %s5 = ssub.s32 1, %s3
  %s6 = scalar_select 0, %s5, %s3
  $region1: #{tpu_custom_call.1} parent=0
    #allocation2 [shape = 'u8[2048]{0}', space=vmem, size = 0x800, scoped, tag = 'input window, operand 0, single buffered']
    #allocation3 [shape = 's32[1]{0}', space=sflag, size = 0x4, scoped, tag = 'scoped memory for tpu_custom_call.1']
    #allocation4 [shape = 's32[1]{0}', space=sflag, size = 0x4, scoped, tag = 'scoped memory for tpu_custom_call.1']
    #allocation5 [shape = 'u8[2048]{0}', space=vmem, size = 0x800, scoped, tag = 'input window, operand 1, single buffered']
    #allocation6 [shape = 's32[1]{0}', space=sflag, size = 0x4, scoped, tag = 'scoped memory for tpu_custom_call.1']
    #allocation7 [shape = 'u8[512]{0}', space=vmem, size = 0x400, scoped, tag = 'output window, operand 0, single buffered']
    %7 = vsyncpa [#allocation3], 0
    %8 = vsyncpa [#allocation6], 0
    %9 = vsyncpa [#allocation4], 0
    // Predicated region
    $region2: #{tpu_custom_call.1} parent=1 // pred_check
      _
    $region3: #{tpu_custom_call.1} parent=1 // pred_check_branch
      %11 = sbr.rel (0) target = $region5
    $region4: #{tpu_custom_call.1} parent=1 // pred_region
      %s12 = sadd.s32 0, 0
      %s14 = ssub.s32 64, 64
      %15 = vsyncadd [#allocation3], %s14
      %s16 = smul.addr %s12, 64
      %s17 = scalar_lea.hbm %s0, %s16
      %s19 = sshll.u32 [#allocation2], 4
      %s20 = int_to_ptr.vmem [resolvable:$true] %s19
      %22 = dma.hbm_to_vmem [thread:$0]  %s17, 64, %s20, [#allocation3]
    $region5: #{tpu_custom_call.1} parent=1 // pred_fallthru
      _
    // Predicated region
    $region6: #{tpu_custom_call.1} parent=1 // pred_check
      _
    $region7: #{tpu_custom_call.1} parent=1 // pred_check_branch
      %24 = sbr.rel (0) target = $region9
    $region8: #{tpu_custom_call.1} parent=1 // pred_region
      %s25 = sadd.s32 0, 0
      %s27 = ssub.s32 64, 64
      %28 = vsyncadd [#allocation6], %s27
      %s29 = smul.addr %s25, 64
      %s30 = scalar_lea.hbm %s1, %s29
      %s32 = sshll.u32 [#allocation5], 4
      %s33 = int_to_ptr.vmem [resolvable:$true] %s32
      %35 = dma.hbm_to_vmem [thread:$0]  %s30, 64, %s33, [#allocation6]
    $region9: #{tpu_custom_call.1} parent=1 // pred_fallthru
      _
    // Predicated region
    $region10: #{tpu_custom_call.1} parent=1 // pred_check
      _
    $region11: #{tpu_custom_call.1} parent=1 // pred_check_branch
      %37 = sbr.rel (0) target = $region13
    $region12: #{tpu_custom_call.1} parent=1 // pred_region
      %38 = dma.done [#allocation3], 64
    $region13: #{tpu_custom_call.1} parent=1 // pred_fallthru
      _
    // Predicated region
    $region14: #{tpu_custom_call.1} parent=1 // pred_check
      _
    $region15: #{tpu_custom_call.1} parent=1 // pred_check_branch
      %40 = sbr.rel (0) target = $region17
    $region16: #{tpu_custom_call.1} parent=1 // pred_region
      %41 = dma.done [#allocation6], 64
    $region17: #{tpu_custom_call.1} parent=1 // pred_fallthru
      _
    %s42 = sadd.s32 0, 0
    %s43 = sadd.s32 0, 0
    %p44 = scmp.eq.s32.totalorder 0, 0
    // Predicated region
    $region18: #{tpu_custom_call.1} parent=1 // pred_check
      %p45 = pneg %p44
    $region19: #{tpu_custom_call.1} parent=1 // pred_check_branch
      %47 = sbr.rel (%p45) target = $region21
    $region20: #{tpu_custom_call.1} parent=1 // pred_region
      %48 = vst [vmem:[#allocation7] sm:$0x1] 0.0
    $region21: #{tpu_custom_call.1} parent=1 // pred_fallthru
      _
    %v49 = vld [vmem:[#allocation2] sm:$0xf]
    %v50 = vld [vmem:[#allocation5] sm:$0xf]
    %v51 = vmul.f32 %v49, %v50
    %vm52 = vcmask 1043456
    %v53 = vsel %vm52, %v51, 0.0
    %v54 = vrot.slane %v53, 4
    %v55 = vadd.f32 %v53, %v54
    %v56 = vrot.slane %v55, 2
    %v57 = vadd.f32 %v55, %v56
    %v58 = vrot.slane %v57, 1
    %v59 = vadd.f32 %v57, %v58
    %v60 = vand.u32 2147483647, %v59
    %v61 = vmin.f32 %v60, 1.0
    %v62 = vsub.f32 1.0, %v61
    %v63 = vmul.f32 %v62, 1.442695
    %v64 = vpow.pop %v63
    %s65 = sadd.s32 0, 0
    %s66 = smul.u32 %s65, 128
    %v67 = vlaneseq
    %v68 = vand.u32 %v67, 127
    %v69 = vstv %s66
    %v70 = vadd.s32 %v69, %v68
    %vm71 = vcmp.lt.s32.totalorder %v70, 16
    %v72 = vsel %vm71, %v64, 0.0
    %v73 = vld [vmem:[#allocation7] sm:$0x1]
    %v74 = vadd.f32 %v73, %v72
    %75 = vst [vmem:[#allocation7] sm:$0x1] %v74
    // Predicated region
    $region22: #{tpu_custom_call.1} parent=1 // pred_check
      _
    $region23: #{tpu_custom_call.1} parent=1 // pred_check_branch
      %77 = sbr.rel (0) target = $region25
    $region24: #{tpu_custom_call.1} parent=1 // pred_region
      %s79 = ssub.s32 16, 16
      %80 = vsyncadd [#allocation4], %s79
      %s82 = sshll.u32 [#allocation7], 4
      %s83 = int_to_ptr.vmem [resolvable:$true] %s82
      %85 = dma.vmem_to_hbm [thread:$0]  %s83, 16, %s2, [#allocation4]
    $region25: #{tpu_custom_call.1} parent=1 // pred_fallthru
      _
    // Predicated region
    $region26: #{tpu_custom_call.1} parent=1 // pred_check
      _
    $region27: #{tpu_custom_call.1} parent=1 // pred_check_branch
      %87 = sbr.rel (0) target = $region29
    $region28: #{tpu_custom_call.1} parent=1 // pred_region
      %88 = dma.done [#allocation4], 16
    $region29: #{tpu_custom_call.1} parent=1 // pred_fallthru
      _
    %89 = vsyncpa [#allocation3], 1
    %90 = vsyncpa [#allocation6], 1
    %91 = vsyncpa [#allocation4], 1

</llo_original>
